<compile_context>
chip_gen: v6e
topology: v6e:2x2x1
jax: 0.10.0
libtpu: 0.0.40
codegen_flags: <defaults>
</compile_context>

<pallas_src>
import functools
import math

import jax
import jax.numpy as jnp
from jax.experimental import pallas as pl
from jax.experimental.pallas import tpu as pltpu


def _round_up(x, m):
    return (x + m - 1) // m * m


def linear_vdp_kernel(mu_ref, sig_ref, wT_ref, vrhs_ref, bias_ref, bsp_ref,
                      mean_ref, var_ref, *, tol):
    mu = mu_ref[...]            # (tm, K)
    sig = sig_ref[...]          # (tm, K)

    # mean = mu @ W.T + bias         (MXU, f32 accumulate)
    mean = (jnp.dot(mu, wT_ref[...], preferred_element_type=jnp.float32)
            + bias_ref[...])

    # var = [sigma | mu^2] @ [(softplus(rho)+W^2).T ; softplus(rho).T] + softplus(b_rho)
    # single fused contraction of length 2K instead of two separate matmuls.
    lhs = jnp.concatenate([sig, mu * mu], axis=-1)          # (tm, 2K)
    var = (jnp.dot(lhs, vrhs_ref[...], preferred_element_type=jnp.float32)
           + bsp_ref[...])

    # clamp_nan: nan->tol, +inf->1/tol, -inf->-1/tol, then clip to [tol, 1/tol]
    var = jnp.nan_to_num(var, nan=tol, posinf=1.0 / tol, neginf=-1.0 / tol)
    var = jnp.clip(var, tol, 1.0 / tol)

    mean_ref[...] = mean.astype(mean_ref.dtype)
    var_ref[...] = var.astype(var_ref.dtype)


def linear_vdp(mu, sigma, weight, rho, bias=None, b_rho=None, *, tol=1e-3,
               tm=512, tn=512, compute_dtype=None):
    """mu, sigma: (..., in_features). weight, rho: (out, in). bias, b_rho: (out,) or None.

    compute_dtype: dtype of the MXU operands (default: promoted input/weight
    dtype, i.e. f32 for f32 inputs). bf16 roughly doubles MXU/DMA throughput
    but loosens accuracy; keep the default f32 for bit-level agreement with
    the f32 reference.
    """
    *lead, K = mu.shape
    M = int(math.prod(lead)) if lead else 1
    N = weight.shape[0]
    out_dtype = mu.dtype
    cdt = compute_dtype or jnp.promote_types(mu.dtype, weight.dtype)
    isz = jnp.dtype(cdt).itemsize
    osz = jnp.dtype(out_dtype).itemsize

    biased = bias is not None
    if not biased:
        bias = jnp.zeros((N,), jnp.float32)
    bsp = (jax.nn.softplus(b_rho).astype(jnp.float32) if (biased and b_rho is not None)
           else jnp.zeros((N,), jnp.float32))

    # ---- tile choices (auto-shrink to fit a conservative VMEM budget) ------
    tm_eff = min(tm, _round_up(M, 8))          # M tile (multiple of 8)
    tn_eff = min(tn, _round_up(N, 128))        # N tile (multiple of 128 -> unmasked vst)

    def tile_bytes(tm_, tn_):
        return (2 * tm_ * K * isz              # mu, sigma tiles
                + 3 * K * tn_ * isz            # W.T block + fused (2K, tn) var RHS
                + 2 * tn_ * 4                  # bias, softplus(b_rho) rows
                + 2 * tm_ * tn_ * osz)         # mean, var output tiles

    budget = 40 << 20                          # double-buffered set well under v7x's 64 MiB
    while 2 * tile_bytes(tm_eff, tn_eff) > budget and (tm_eff > 8 or tn_eff > 128):
        if tm_eff >= tn_eff and tm_eff > 8:
            tm_eff = max(8, _round_up(tm_eff // 2, 8))
        elif tn_eff > 128:
            tn_eff = max(128, _round_up(tn_eff // 2, 128))
        else:
            tm_eff = max(8, _round_up(tm_eff // 2, 8))

    M_pad = _round_up(M, tm_eff)
    N_pad = _round_up(N, tn_eff)
    gm, gn = M_pad // tm_eff, N_pad // tn_eff

    # ---- weight-only math hoisted out of the kernel ------------------------
    wT = weight.T.astype(cdt)                                   # (K, N)
    w_sigT = jax.nn.softplus(rho).T.astype(cdt)                 # softplus(rho).T
    vrhs = jnp.concatenate([w_sigT + wT * wT, w_sigT], axis=0)  # (2K, N)

    def pad2(x, r, c):
        pr, pc = r - x.shape[0], c - x.shape[1]
        return jnp.pad(x, ((0, pr), (0, pc))) if (pr or pc) else x

    mu2 = pad2(mu.reshape(M, K).astype(cdt), M_pad, K)
    sig2 = pad2(sigma.reshape(M, K).astype(cdt), M_pad, K)
    wT_p = pad2(wT, K, N_pad)
    vrhs_p = pad2(vrhs, 2 * K, N_pad)
    b_p = pad2(bias.reshape(1, N).astype(jnp.float32), 1, N_pad)
    bsp_p = pad2(bsp.reshape(1, N), 1, N_pad)

    # ---- grid-order heuristic: keep the bigger operand set resident --------
    # With the N axis innermost the activation tiles stay fixed (streamed once)
    # while the weight blocks are re-fetched gm times, and vice versa. Pick the
    # order that minimizes re-streamed HBM bytes.
    input_bytes = 2 * M_pad * K * isz
    weight_bytes = 3 * K * N_pad * isz + 2 * N_pad * 4
    m_outer = (gm - 1) * weight_bytes <= (gn - 1) * input_bytes
    if m_outer:
        grid = (gm, gn)
        idx_m = lambda a, b: (a, 0)      # mu / sigma tiles
        idx_n = lambda a, b: (0, b)      # weight blocks / bias rows
        idx_mn = lambda a, b: (a, b)     # outputs
    else:
        grid = (gn, gm)
        idx_m = lambda a, b: (b, 0)
        idx_n = lambda a, b: (0, a)
        idx_mn = lambda a, b: (b, a)

    # ---- scoped-VMEM budget derived from the final tiles --------------------
    inter = tm_eff * 2 * K * isz + 2 * tm_eff * tn_eff * 4     # fused lhs + f32 results
    vmem_bytes = min(2 * tile_bytes(tm_eff, tn_eff) + inter + (8 << 20), 64 << 20)

    cost = pl.CostEstimate(
        flops=6 * M * N * K + 8 * M * N,
        transcendentals=0,
        bytes_accessed=(2 * M * K * isz + 3 * K * N * isz + 2 * N * 4
                        + 2 * M * N * osz))

    kernel = functools.partial(linear_vdp_kernel, tol=tol)

    mean, var = pl.pallas_call(
        kernel,
        out_shape=(jax.ShapeDtypeStruct((M_pad, N_pad), out_dtype),
                   jax.ShapeDtypeStruct((M_pad, N_pad), out_dtype)),
        grid_spec=pltpu.PrefetchScalarGridSpec(
            num_scalar_prefetch=0,
            grid=grid,
            in_specs=[
                pl.BlockSpec((tm_eff, K), idx_m),        # mu tile
                pl.BlockSpec((tm_eff, K), idx_m),        # sigma tile
                pl.BlockSpec((K, tn_eff), idx_n),        # weight.T block
                pl.BlockSpec((2 * K, tn_eff), idx_n),    # fused variance RHS
                pl.BlockSpec((1, tn_eff), idx_n),        # bias
                pl.BlockSpec((1, tn_eff), idx_n),        # softplus(b_rho)
            ],
            out_specs=[
                pl.BlockSpec((tm_eff, tn_eff), idx_mn),  # mean
                pl.BlockSpec((tm_eff, tn_eff), idx_mn),  # var
            ],
        ),
        compiler_params=pltpu.CompilerParams(
            dimension_semantics=("parallel", "parallel"),
            vmem_limit_bytes=vmem_bytes),
        cost_estimate=cost,
    )(mu2, sig2, wT_p, vrhs_p, b_p, bsp_p)

    mean = mean[:M, :N].reshape(*lead, N)
    var = var[:M, :N].reshape(*lead, N)
    return mean, var


def linear_vdp_ref(mu, sigma, weight, rho, bias, b_rho, tol=1e-3):
    """Pure-JAX reference mirroring the PyTorch forward (biased=True)."""
    w_sig = jax.nn.softplus(rho)
    mean = mu @ weight.T + bias
    var = (sigma @ (w_sig + weight ** 2).T
           + (mu ** 2) @ w_sig.T
           + jax.nn.softplus(b_rho))
    var = jnp.nan_to_num(var, nan=tol, posinf=1.0 / tol, neginf=-1.0 / tol)
    var = jnp.clip(var, tol, 1.0 / tol)
    return mean, var


if __name__ == "__main__":
    batch, seq, in_features, out_features = 2, 8, 32, 32
    var_init, tol = 1e-8, 1e-3

    key = jax.random.PRNGKey(0)
    k_mu, k_sig, k_w, k_rho, k_b, k_brho = jax.random.split(key, 6)

    # deterministic parameter init matching the module's __init__ distributions
    bound_w = math.sqrt(6.0 / (in_features + out_features))
    weight = jax.random.uniform(k_w, (out_features, in_features),
                                minval=-bound_w, maxval=bound_w, dtype=jnp.float32)
    rho = jax.random.uniform(k_rho, (out_features, in_features),
                             minval=-var_init * bound_w, maxval=var_init * bound_w,
                             dtype=jnp.float32)
    bound_b = 1.0 / math.sqrt(in_features)
    bias = jax.random.uniform(k_b, (out_features,),
                              minval=-bound_b, maxval=bound_b, dtype=jnp.float32)
    b_rho = jax.random.uniform(k_brho, (out_features,),
                               minval=-var_init * bound_b, maxval=var_init * bound_b,
                               dtype=jnp.float32)

    # inputs: mu arbitrary, sigma non-negative (variances)
    mu = jax.random.normal(k_mu, (batch, seq, in_features), dtype=jnp.float32)
    sigma = jnp.abs(jax.random.normal(k_sig, (batch, seq, in_features),
                                      dtype=jnp.float32)) * 0.1

    mean, var = linear_vdp(mu, sigma, weight, rho, bias, b_rho, tol=tol)
    jax.block_until_ready((mean, var))

    mean_ref, var_ref = linear_vdp_ref(mu, sigma, weight, rho, bias, b_rho, tol=tol)
    assert mean.shape == (batch, seq, out_features)
    assert var.shape == (batch, seq, out_features)
    assert jnp.allclose(mean, mean_ref, atol=1e-5, rtol=1e-5)
    assert jnp.allclose(var, var_ref, atol=1e-5, rtol=1e-5)

    print("KERNEL_OK")
</pallas_src>

<mosaic_0001>
module attributes {stable_mosaic.version = 11 : i64} {
  func.func @linear_vdp_kernel(%arg0: i32, %arg1: i32, %arg2: memref<16x32xf32, #tpu.memory_space<vmem>>, %arg3: memref<16x32xf32, #tpu.memory_space<vmem>>, %arg4: memref<32x128xf32, #tpu.memory_space<vmem>>, %arg5: memref<64x128xf32, #tpu.memory_space<vmem>>, %arg6: memref<1x128xf32, #tpu.memory_space<vmem>>, %arg7: memref<1x128xf32, #tpu.memory_space<vmem>>, %arg8: memref<16x128xf32, #tpu.memory_space<vmem>>, %arg9: memref<16x128xf32, #tpu.memory_space<vmem>>) attributes {dimension_semantics = [#tpu.dimension_semantics<parallel>, #tpu.dimension_semantics<parallel>], iteration_bounds = array<i64: 1, 1>, scalar_prefetch = 0 : i64, scratch_operands = 0 : i64, tpu.core_type = #tpu.core_type<tc>, window_params = [{transform_indices = @transform_0, window_bounds = array<i64: 16, 32>}, {transform_indices = @transform_1, window_bounds = array<i64: 16, 32>}, {transform_indices = @transform_2, window_bounds = array<i64: 32, 128>}, {transform_indices = @transform_3, window_bounds = array<i64: 64, 128>}, {transform_indices = @transform_4, window_bounds = array<i64: 1, 128>}, {transform_indices = @transform_5, window_bounds = array<i64: 1, 128>}, {transform_indices = @transform_6, window_bounds = array<i64: 16, 128>}, {transform_indices = @transform_7, window_bounds = array<i64: 16, 128>}]} {
    %c0 = arith.constant 0 : index
    %c0_0 = arith.constant 0 : index
    %0 = vector.load %arg2[%c0, %c0_0] : memref<16x32xf32, #tpu.memory_space<vmem>>, vector<16x32xf32>
    %c0_1 = arith.constant 0 : index
    %c0_2 = arith.constant 0 : index
    %1 = vector.load %arg3[%c0_1, %c0_2] : memref<16x32xf32, #tpu.memory_space<vmem>>, vector<16x32xf32>
    %c0_3 = arith.constant 0 : index
    %c0_4 = arith.constant 0 : index
    %2 = vector.load %arg4[%c0_3, %c0_4] : memref<32x128xf32, #tpu.memory_space<vmem>>, vector<32x128xf32>
    %cst = arith.constant dense<0.000000e+00> : vector<16x128xf32>
    %3 = tpu.matmul %0, %2, %cst {dimension_numbers = #tpu.dot_dimension_numbers<[1], [0], [0], [1], [0, 0, 1, 1], [], []>} : vector<16x32xf32>, vector<32x128xf32>, vector<16x128xf32> -> vector<16x128xf32>
    %c0_5 = arith.constant 0 : index
    %c0_6 = arith.constant 0 : index
    %4 = vector.load %arg6[%c0_5, %c0_6] : memref<1x128xf32, #tpu.memory_space<vmem>>, vector<1x128xf32>
    %5 = vector.broadcast %4 : vector<1x128xf32> to vector<16x128xf32>
    %6 = arith.addf %3, %5 : vector<16x128xf32>
    %7 = arith.mulf %0, %0 : vector<16x32xf32>
    %8 = tpu.concatenate %1, %7 in 1 : vector<16x32xf32>, vector<16x32xf32> -> vector<16x64xf32>
    %c0_7 = arith.constant 0 : index
    %c0_8 = arith.constant 0 : index
    %9 = vector.load %arg5[%c0_7, %c0_8] : memref<64x128xf32, #tpu.memory_space<vmem>>, vector<64x128xf32>
    %cst_9 = arith.constant dense<0.000000e+00> : vector<16x128xf32>
    %10 = tpu.matmul %8, %9, %cst_9 {dimension_numbers = #tpu.dot_dimension_numbers<[1], [0], [0], [1], [0, 0, 1, 1], [], []>} : vector<16x64xf32>, vector<64x128xf32>, vector<16x128xf32> -> vector<16x128xf32>
    %c0_10 = arith.constant 0 : index
    %c0_11 = arith.constant 0 : index
    %11 = vector.load %arg7[%c0_10, %c0_11] : memref<1x128xf32, #tpu.memory_space<vmem>>, vector<1x128xf32>
    %12 = vector.broadcast %11 : vector<1x128xf32> to vector<16x128xf32>
    %13 = arith.addf %10, %12 : vector<16x128xf32>
    %cst_12 = arith.constant 1.000000e-03 : f32
    %cst_13 = arith.constant -1.000000e+03 : f32
    %cst_14 = arith.constant 1.000000e+03 : f32
    %14 = arith.cmpf one, %13, %13 : vector<16x128xf32>
    %15 = vector.broadcast %cst_12 : f32 to vector<16x128xf32>
    %16 = arith.select %14, %15, %13 : vector<16x128xi1>, vector<16x128xf32>
    %cst_15 = arith.constant 0x7F800000 : f32
    %17 = vector.broadcast %cst_15 : f32 to vector<16x128xf32>
    %18 = arith.cmpf oeq, %16, %17 : vector<16x128xf32>
    %19 = vector.broadcast %cst_14 : f32 to vector<16x128xf32>
    %20 = arith.select %18, %19, %16 : vector<16x128xi1>, vector<16x128xf32>
    %cst_16 = arith.constant 0xFF800000 : f32
    %21 = vector.broadcast %cst_16 : f32 to vector<16x128xf32>
    %22 = arith.cmpf oeq, %20, %21 : vector<16x128xf32>
    %23 = vector.broadcast %cst_13 : f32 to vector<16x128xf32>
    %24 = arith.select %22, %23, %20 : vector<16x128xi1>, vector<16x128xf32>
    %cst_17 = arith.constant 1.000000e-03 : f32
    %cst_18 = arith.constant 1.000000e+03 : f32
    %25 = vector.broadcast %cst_17 : f32 to vector<16x128xf32>
    %26 = arith.maximumf %25, %24 : vector<16x128xf32>
    %27 = vector.broadcast %cst_18 : f32 to vector<16x128xf32>
    %28 = arith.minimumf %27, %26 : vector<16x128xf32>
    %c0_19 = arith.constant 0 : index
    %c0_20 = arith.constant 0 : index
    %29 = vector.load %arg8[%c0_19, %c0_20] : memref<16x128xf32, #tpu.memory_space<vmem>>, vector<16x128xf32>
    tpu.vector_store %arg8[%c0_19, %c0_20], %6 {strides = array<i32>} : memref<16x128xf32, #tpu.memory_space<vmem>>, vector<16x128xf32>,
    %c0_21 = arith.constant 0 : index
    %c0_22 = arith.constant 0 : index
    %30 = vector.load %arg9[%c0_21, %c0_22] : memref<16x128xf32, #tpu.memory_space<vmem>>, vector<16x128xf32>
    tpu.vector_store %arg9[%c0_21, %c0_22], %28 {strides = array<i32>} : memref<16x128xf32, #tpu.memory_space<vmem>>, vector<16x128xf32>,
    return
  }
  func.func @transform_0(%arg0: i32, %arg1: i32) -> (i32, i32) {
    %c0_i32 = arith.constant 0 : i32
    %c0_i32_0 = arith.constant 0 : i32
    return %arg0, %c0_i32 : i32, i32
  }
  func.func @transform_1(%arg0: i32, %arg1: i32) -> (i32, i32) {
    %c0_i32 = arith.constant 0 : i32
    %c0_i32_0 = arith.constant 0 : i32
    return %arg0, %c0_i32 : i32, i32
  }
  func.func @transform_2(%arg0: i32, %arg1: i32) -> (i32, i32) {
    %c0_i32 = arith.constant 0 : i32
    %c0_i32_0 = arith.constant 0 : i32
    return %c0_i32, %arg1 : i32, i32
  }
  func.func @transform_3(%arg0: i32, %arg1: i32) -> (i32, i32) {
    %c0_i32 = arith.constant 0 : i32
    %c0_i32_0 = arith.constant 0 : i32
    return %c0_i32, %arg1 : i32, i32
  }
  func.func @transform_4(%arg0: i32, %arg1: i32) -> (i32, i32) {
    %c0_i32 = arith.constant 0 : i32
    %c0_i32_0 = arith.constant 0 : i32
    return %c0_i32, %arg1 : i32, i32
  }
  func.func @transform_5(%arg0: i32, %arg1: i32) -> (i32, i32) {
    %c0_i32 = arith.constant 0 : i32
    %c0_i32_0 = arith.constant 0 : i32
    return %c0_i32, %arg1 : i32, i32
  }
  func.func @transform_6(%arg0: i32, %arg1: i32) -> (i32, i32) {
    %c0_i32 = arith.constant 0 : i32
    return %arg0, %arg1 : i32, i32
  }
  func.func @transform_7(%arg0: i32, %arg1: i32) -> (i32, i32) {
    %c0_i32 = arith.constant 0 : i32
    return %arg0, %arg1 : i32, i32
  }
}

</mosaic_0001>

<llo_original>
// kernel: tpu_custom_call.1
$region0: #{tpu_custom_call.1}
  #allocation0 [shape = 'u32[]', space=smem, size = 0x4, offset = 0x4, fixed_abs, tag = 'smem constant byte address 0x4 - core index']
  #allocation1 [shape = 'u32[144,128]{1,0:T(1,128)}', space=vmem, size = 0x12000, scoped, tag = 'internal scratch']
  %s0 = inlined_call_operand.hbm [shape: f32[16,32], index: 0, kind: input, shape index: {}]
  %s1 = inlined_call_operand.hbm [shape: f32[16,32], index: 1, kind: input, shape index: {}]
  %s2 = inlined_call_operand.hbm [shape: f32[32,128], index: 2, kind: input, shape index: {}]
  %s3 = inlined_call_operand.hbm [shape: f32[64,128], index: 3, kind: input, shape index: {}]
  %s4 = inlined_call_operand.vmem [shape: f32[1,128], index: 4, kind: input, shape index: {}]
  %s5 = inlined_call_operand.vmem [shape: f32[1,128], index: 5, kind: input, shape index: {}]
  %s6 = inlined_call_operand.hbm [shape: f32[16,128], index: 6, kind: output, shape index: {0}]
  %s7 = inlined_call_operand.hbm [shape: f32[16,128], index: 7, kind: output, shape index: {1}]
  %8 = xla_tuple %s6, %s7
  %s9 = sld [smem:[#allocation0]]
  $region58: #{tpu_custom_call.1} parent=0
    _
  %s11 = ssub.s32 1, %s9
  %s12 = scalar_select 0, %s11, %s9
  $region1: #{tpu_custom_call.1} parent=0
    #allocation2 [shape = 'u8[8192]{0}', space=vmem, size = 0x2000, scoped, tag = 'input window, operand 0, single buffered']
    #allocation3 [shape = 's32[1]{0}', space=sflag, size = 0x4, scoped, tag = 'scoped memory for tpu_custom_call.1']
    #allocation4 [shape = 's32[1]{0}', space=sflag, size = 0x4, scoped, tag = 'scoped memory for tpu_custom_call.1']
    #allocation5 [shape = 'u8[8192]{0}', space=vmem, size = 0x2000, scoped, tag = 'input window, operand 1, single buffered']
    #allocation6 [shape = 's32[1]{0}', space=sflag, size = 0x4, scoped, tag = 'scoped memory for tpu_custom_call.1']
    #allocation7 [shape = 'u8[16384]{0}', space=vmem, size = 0x4000, scoped, tag = 'input window, operand 2, single buffered']
    #allocation8 [shape = 'u8[32768]{0}', space=vmem, size = 0x8000, scoped, tag = 'input window, operand 3, single buffered']
    #allocation9 [shape = 's32[1]{0}', space=sflag, size = 0x4, scoped, tag = 'scoped memory for tpu_custom_call.1']
    #allocation10 [shape = 'u8[8192]{0}', space=vmem, size = 0x2000, scoped, tag = 'output window, operand 0, single buffered']
    #allocation11 [shape = 'u8[8192]{0}', space=vmem, size = 0x2000, scoped, tag = 'output window, operand 1, single buffered']
    #allocation12 [shape = 's32[1]{0}', space=sflag, size = 0x4, scoped, tag = 'scoped memory for tpu_custom_call.1']
    %13 = vsyncpa [#allocation3], 0
    %14 = vsyncpa [#allocation6], 0
    %15 = vsyncpa [#allocation9], 0
    %16 = vsyncpa [#allocation4], 0
    %17 = vsyncpa [#allocation12], 0
    // Predicated region
    $region2: #{tpu_custom_call.1} parent=1 // pred_check
      _
    $region3: #{tpu_custom_call.1} parent=1 // pred_check_branch
      %19 = sbr.rel (0) target = $region5
    $region4: #{tpu_custom_call.1} parent=1 // pred_region
      %s21 = ssub.s32 256, 256
      %22 = vsyncadd [#allocation3], %s21
      %s23 = sshll.u32 [#allocation2], 4
      %s24 = int_to_ptr.vmem [resolvable:$true] %s23
      %29 = dma.hbm_to_vmem [thread:$0]  %s0, 256, %s24, [#allocation3], 128, 128, 8
    $region5: #{tpu_custom_call.1} parent=1 // pred_fallthru
      _
    // Predicated region
    $region6: #{tpu_custom_call.1} parent=1 // pred_check
      _
    $region7: #{tpu_custom_call.1} parent=1 // pred_check_branch
      %31 = sbr.rel (0) target = $region9
    $region8: #{tpu_custom_call.1} parent=1 // pred_region
      %s33 = ssub.s32 256, 256
      %34 = vsyncadd [#allocation6], %s33
      %s35 = sshll.u32 [#allocation5], 4
      %s36 = int_to_ptr.vmem [resolvable:$true] %s35
      %41 = dma.hbm_to_vmem [thread:$0]  %s1, 256, %s36, [#allocation6], 128, 128, 8
    $region9: #{tpu_custom_call.1} parent=1 // pred_fallthru
      _
    // Predicated region
    $region10: #{tpu_custom_call.1} parent=1 // pred_check
      _
    $region11: #{tpu_custom_call.1} parent=1 // pred_check_branch
      %43 = sbr.rel (0) target = $region13
    $region12: #{tpu_custom_call.1} parent=1 // pred_region
      %s45 = ssub.s32 512, 512
      %46 = vsyncadd [#allocation6], %s45
      %s47 = sshll.u32 [#allocation7], 4
      %s48 = int_to_ptr.vmem [resolvable:$true] %s47
      %53 = dma.hbm_to_vmem [thread:$0]  %s2, 512, %s48, [#allocation6], 128, 128, 8
    $region13: #{tpu_custom_call.1} parent=1 // pred_fallthru
      _
    // Predicated region
    $region14: #{tpu_custom_call.1} parent=1 // pred_check
      _
    $region15: #{tpu_custom_call.1} parent=1 // pred_check_branch
      %55 = sbr.rel (0) target = $region17
    $region16: #{tpu_custom_call.1} parent=1 // pred_region
      %s57 = ssub.s32 1024, 1024
      %58 = vsyncadd [#allocation9], %s57
      %s59 = sshll.u32 [#allocation8], 4
      %s60 = int_to_ptr.vmem [resolvable:$true] %s59
      %65 = dma.hbm_to_vmem [thread:$0]  %s3, 1024, %s60, [#allocation9], 128, 128, 8
    $region17: #{tpu_custom_call.1} parent=1 // pred_fallthru
      _
    // Predicated region
    $region18: #{tpu_custom_call.1} parent=1 // pred_check
      _
    $region19: #{tpu_custom_call.1} parent=1 // pred_check_branch
      %67 = sbr.rel (0) target = $region21
    $region20: #{tpu_custom_call.1} parent=1 // pred_region
      _
    $region21: #{tpu_custom_call.1} parent=1 // pred_fallthru
      _
    // Predicated region
    $region22: #{tpu_custom_call.1} parent=1 // pred_check
      _
    $region23: #{tpu_custom_call.1} parent=1 // pred_check_branch
      %69 = sbr.rel (0) target = $region25
    $region24: #{tpu_custom_call.1} parent=1 // pred_region
      _
    $region25: #{tpu_custom_call.1} parent=1 // pred_fallthru
      _
    // Predicated region
    $region26: #{tpu_custom_call.1} parent=1 // pred_check
      _
    $region27: #{tpu_custom_call.1} parent=1 // pred_check_branch
      %71 = sbr.rel (0) target = $region29
    $region28: #{tpu_custom_call.1} parent=1 // pred_region
      %72 = dma.done [#allocation3], 256
    $region29: #{tpu_custom_call.1} parent=1 // pred_fallthru
      _
    // Predicated region
    $region30: #{tpu_custom_call.1} parent=1 // pred_check
      _
    $region31: #{tpu_custom_call.1} parent=1 // pred_check_branch
      %74 = sbr.rel (0) target = $region33
    $region32: #{tpu_custom_call.1} parent=1 // pred_region
      %75 = dma.done [#allocation6], 256
    $region33: #{tpu_custom_call.1} parent=1 // pred_fallthru
      _
    // Predicated region
    $region34: #{tpu_custom_call.1} parent=1 // pred_check
      _
    $region35: #{tpu_custom_call.1} parent=1 // pred_check_branch
      %77 = sbr.rel (0) target = $region37
    $region36: #{tpu_custom_call.1} parent=1 // pred_region
      %78 = dma.done [#allocation6], 512
    $region37: #{tpu_custom_call.1} parent=1 // pred_fallthru
      _
    // Predicated region
    $region38: #{tpu_custom_call.1} parent=1 // pred_check
      _
    $region39: #{tpu_custom_call.1} parent=1 // pred_check_branch
      %80 = sbr.rel (0) target = $region41
    $region40: #{tpu_custom_call.1} parent=1 // pred_region
      %81 = dma.done [#allocation9], 1024
    $region41: #{tpu_custom_call.1} parent=1 // pred_fallthru
      _
    %v82 = vld [vmem:[#allocation2] sm:$0xff]
    %v83 = vld [vmem:[#allocation2 + $0x8] sm:$0xff]
    %v84 = vld [vmem:[#allocation5] sm:$0xff]
    %v85 = vld [vmem:[#allocation5 + $0x8] sm:$0xff]
    %v86 = vld [vmem:[#allocation7] sm:$0xff]
    %v87 = vld [vmem:[#allocation7 + $0x8] sm:$0xff]
    %v88 = vld [vmem:[#allocation7 + $0x10] sm:$0xff]
    %v89 = vld [vmem:[#allocation7 + $0x18] sm:$0xff]
    %v90 = vld [vmem:[%s4] sm:$0x1]
    %v92 = vlaneseq
    %v93 = vshrl.u32 %v92, 7
    %v94 = vsub.s32 0, %v93
    %v95 = vrot.slane %v90, %v94
    %vm97 = vcmask 261120
    %v99 = vsel %vm97, %v82, 0
    %v102 = vsel %vm97, %v83, 0
    %104 = vmatprep.subr.mxu0 0.0
    %105 = vmatpush1.msra.mxu0 0.0
    %106 = vmatprep.subr.mxu0 0.0
    %107 = vmatpush1.msra.mxu0 0.0
    %108 = vmatprep.subr.mxu0 0.0
    %109 = vmatpush1.msra.mxu0 0.0
    %110 = vmatprep.subr.mxu0 0.0
    %111 = vmatpush1.msra.mxu0 0.0
    %112 = vmatprep.subr.mxu0 0.0
    %113 = vmatpush1.msra.mxu0 0.0
    %114 = vmatprep.subr.mxu0 0.0
    %115 = vmatpush1.msra.mxu0 0.0
    %116 = vmatprep.subr.mxu0 0.0
    %117 = vmatpush1.msra.mxu0 0.0
    %118 = vmatprep.subr.mxu0 0.0
    %119 = vmatpush1.msra.mxu0 0.0
    %120 = vmatprep.subr.mxu0 0.0
    %121 = vmatpush1.msra.mxu0 0.0
    %122 = vmatprep.subr.mxu0 0.0
    %123 = vmatpush1.msra.mxu0 0.0
    %124 = vmatprep.subr.mxu0 0.0
    %125 = vmatpush1.msra.mxu0 0.0
    %126 = vmatprep.subr.mxu0 0.0
    %127 = vmatpush1.msra.mxu0 0.0
    %128 = vmatprep.subr.mxu0 0.0
    %129 = vmatpush1.msra.mxu0 %v89
    %130 = vmatprep.subr.mxu0 0.0
    %131 = vmatpush1.msra.mxu0 %v88
    %132 = vmatprep.subr.mxu0 0.0
    %133 = vmatpush1.msra.mxu0 %v87
    %134 = vmatprep.subr.mxu0 0.0
    %135 = vmatpush1.msra.mxu0 %v86
    %136 = vmatprep.subr.mxu0 0.0
    %137 = vmatpush2.msra.mxu0 0.0
    %138 = vmatprep.subr.mxu0 0.0
    %139 = vmatpush2.msra.mxu0 0.0
    %140 = vmatprep.subr.mxu0 0.0
    %141 = vmatpush2.msra.mxu0 0.0
    %142 = vmatprep.subr.mxu0 0.0
    %143 = vmatpush2.msra.mxu0 0.0
    %144 = vmatprep.subr.mxu0 0.0
    %145 = vmatpush2.msra.mxu0 0.0
    %146 = vmatprep.subr.mxu0 0.0
    %147 = vmatpush2.msra.mxu0 0.0
    %148 = vmatprep.subr.mxu0 0.0
    %149 = vmatpush2.msra.mxu0 0.0
    %150 = vmatprep.subr.mxu0 0.0
    %151 = vmatpush2.msra.mxu0 0.0
    %152 = vmatprep.subr.mxu0 0.0
    %153 = vmatpush2.msra.mxu0 0.0
    %154 = vmatprep.subr.mxu0 0.0
    %155 = vmatpush2.msra.mxu0 0.0
    %156 = vmatprep.subr.mxu0 0.0
    %157 = vmatpush2.msra.mxu0 0.0
    %158 = vmatprep.subr.mxu0 0.0
    %159 = vmatpush2.msra.mxu0 0.0
    %160 = vmatprep.subr.mxu0 0.0
    %161 = vmatpush2.msra.mxu0 0.0
    %162 = vmatprep.subr.mxu0 0.0
    %163 = vmatpush2.msra.mxu0 0.0
    %164 = vmatprep.subr.mxu0 0.0
    %165 = vmatpush2.msra.mxu0 0.0
    %166 = vmatprep.subr.mxu0 0.0
    %167 = vmatpush2.msra.mxu0 0.0
    %168 = vmatprep.mubr.f32.mxu0 0.0
    %169 = vmatmul.mubr.f32.gmra.mxu0 %v99
    %v170 = vpop.f32.mrf.mxu0
    %v171 = vadd.f32 %v95, %v170
    %v172 = vpop.f32.mrf.mxu0
    %173 = vmatprep.mubr.f32.mxu0 0.0
    %174 = vmatmul.mubr.f32.gmra.mxu0 %v102
    %v175 = vpop.f32.mrf.mxu0
    %v176 = vadd.f32 %v95, %v175
    %v177 = vpop.f32.mrf.mxu0
    %178 = vdwg.mxu0
    %v179 = vmul.f32 %v82, %v82
    %v180 = vmul.f32 %v83, %v83
    %183 = vrot.lane.b32.xlu0 %v179, 32
    %v184 = vpop.permute.xlu0 %183
    %185 = vrot.lane.b32.xlu0 %v180, 32
    %v186 = vpop.permute.xlu0 %185
    %v189 = vsel %vm97, %v84, %v184
    %v190 = vsel %vm97, %v85, %v186
    %v191 = vld [vmem:[#allocation8] sm:$0xff]
    %v192 = vld [vmem:[#allocation8 + $0x8] sm:$0xff]
    %v193 = vld [vmem:[#allocation8 + $0x10] sm:$0xff]
    %v194 = vld [vmem:[#allocation8 + $0x18] sm:$0xff]
    %v195 = vld [vmem:[#allocation8 + $0x20] sm:$0xff]
    %v196 = vld [vmem:[#allocation8 + $0x28] sm:$0xff]
    %v197 = vld [vmem:[#allocation8 + $0x30] sm:$0xff]
    %v198 = vld [vmem:[#allocation8 + $0x38] sm:$0xff]
    %v199 = vld [vmem:[%s5] sm:$0x1]
    %v201 = vlaneseq
    %v202 = vshrl.u32 %v201, 7
    %v203 = vsub.s32 0, %v202
    %v204 = vrot.slane %v199, %v203
    %vm206 = vcmask 523264
    %v208 = vsel %vm206, %v189, 0
    %v211 = vsel %vm206, %v190, 0
    %213 = vmatprep.subr.mxu0 0.0
    %214 = vmatpush1.msra.mxu0 0.0
    %215 = vmatprep.subr.mxu0 0.0
    %216 = vmatpush1.msra.mxu0 0.0
    %217 = vmatprep.subr.mxu0 0.0
    %218 = vmatpush1.msra.mxu0 0.0
    %219 = vmatprep.subr.mxu0 0.0
    %220 = vmatpush1.msra.mxu0 0.0
    %221 = vmatprep.subr.mxu0 0.0
    %222 = vmatpush1.msra.mxu0 0.0
    %223 = vmatprep.subr.mxu0 0.0
    %224 = vmatpush1.msra.mxu0 0.0
    %225 = vmatprep.subr.mxu0 0.0
    %226 = vmatpush1.msra.mxu0 0.0
    %227 = vmatprep.subr.mxu0 0.0
    %228 = vmatpush1.msra.mxu0 0.0
    %229 = vmatprep.subr.mxu0 0.0
    %230 = vmatpush1.msra.mxu0 %v198
    %231 = vmatprep.subr.mxu0 0.0
    %232 = vmatpush1.msra.mxu0 %v197
    %233 = vmatprep.subr.mxu0 0.0
    %234 = vmatpush1.msra.mxu0 %v196
    %235 = vmatprep.subr.mxu0 0.0
    %236 = vmatpush1.msra.mxu0 %v195
    %237 = vmatprep.subr.mxu0 0.0
    %238 = vmatpush1.msra.mxu0 %v194
    %239 = vmatprep.subr.mxu0 0.0
    %240 = vmatpush1.msra.mxu0 %v193
    %241 = vmatprep.subr.mxu0 0.0
    %242 = vmatpush1.msra.mxu0 %v192
    %243 = vmatprep.subr.mxu0 0.0
    %244 = vmatpush1.msra.mxu0 %v191
    %245 = vmatprep.subr.mxu0 0.0
    %246 = vmatpush2.msra.mxu0 0.0
    %247 = vmatprep.subr.mxu0 0.0
    %248 = vmatpush2.msra.mxu0 0.0
    %249 = vmatprep.subr.mxu0 0.0
    %250 = vmatpush2.msra.mxu0 0.0
    %251 = vmatprep.subr.mxu0 0.0
    %252 = vmatpush2.msra.mxu0 0.0
    %253 = vmatprep.subr.mxu0 0.0
    %254 = vmatpush2.msra.mxu0 0.0
    %255 = vmatprep.subr.mxu0 0.0
    %256 = vmatpush2.msra.mxu0 0.0
    %257 = vmatprep.subr.mxu0 0.0
    %258 = vmatpush2.msra.mxu0 0.0
    %259 = vmatprep.subr.mxu0 0.0
    %260 = vmatpush2.msra.mxu0 0.0
    %261 = vmatprep.subr.mxu0 0.0
    %262 = vmatpush2.msra.mxu0 0.0
    %263 = vmatprep.subr.mxu0 0.0
    %264 = vmatpush2.msra.mxu0 0.0
    %265 = vmatprep.subr.mxu0 0.0
    %266 = vmatpush2.msra.mxu0 0.0
    %267 = vmatprep.subr.mxu0 0.0
    %268 = vmatpush2.msra.mxu0 0.0
    %269 = vmatprep.subr.mxu0 0.0
    %270 = vmatpush2.msra.mxu0 0.0
    %271 = vmatprep.subr.mxu0 0.0
    %272 = vmatpush2.msra.mxu0 0.0
    %273 = vmatprep.subr.mxu0 0.0
    %274 = vmatpush2.msra.mxu0 0.0
    %275 = vmatprep.subr.mxu0 0.0
    %276 = vmatpush2.msra.mxu0 0.0
    %277 = vmatprep.mubr.f32.mxu0 0.0
    %278 = vmatmul.mubr.f32.gmra.mxu0 %v208
    %v279 = vpop.f32.mrf.mxu0
    %v280 = vadd.f32 %v204, %v279
    %v281 = vpop.f32.mrf.mxu0
    %282 = vmatprep.mubr.f32.mxu0 0.0
    %283 = vmatmul.mubr.f32.gmra.mxu0 %v211
    %v284 = vpop.f32.mrf.mxu0
    %v285 = vadd.f32 %v204, %v284
    %v286 = vpop.f32.mrf.mxu0
    %287 = vdwg.mxu0
    %vm288 = vcmp.ne.f32.partialorder %v280, %v280
    %vm289 = vcmp.ne.f32.partialorder %v285, %v285
    %v290 = vsel %vm288, 0.001, %v280
    %v291 = vsel %vm289, 0.001, %v285
    %vm292 = vcmp.eq.f32.partialorder %v290, inf
    %vm293 = vcmp.eq.f32.partialorder %v291, inf
    %v294 = vsel %vm292, 1000.0, %v290
    %v295 = vsel %vm293, 1000.0, %v291
    %vm296 = vcmp.eq.f32.partialorder %v294, -inf
    %vm297 = vcmp.eq.f32.partialorder %v295, -inf
    %v298 = vsel %vm296, -1000.0, %v294
    %v299 = vsel %vm297, -1000.0, %v295
    %v300 = vmax.f32 %v298, 0.001
    %v301 = vmax.f32 %v299, 0.001
    %v302 = vmin.f32 %v300, 1000.0
    %v303 = vmin.f32 %v301, 1000.0
    %304 = vst [vmem:[#allocation10] sm:$0xff] %v171
    %305 = vst [vmem:[#allocation10 + $0x8] sm:$0xff] %v176
    %306 = vst [vmem:[#allocation11] sm:$0xff] %v302
    %307 = vst [vmem:[#allocation11 + $0x8] sm:$0xff] %v303
    // Predicated region
    $region42: #{tpu_custom_call.1} parent=1 // pred_check
      _
    $region43: #{tpu_custom_call.1} parent=1 // pred_check_branch
      %309 = sbr.rel (0) target = $region45
    $region44: #{tpu_custom_call.1} parent=1 // pred_region
      %s311 = ssub.s32 256, 256
      %312 = vsyncadd [#allocation4], %s311
      %s313 = sshll.u32 [#allocation10], 4
      %s314 = int_to_ptr.vmem [resolvable:$true] %s313
      %319 = dma.vmem_to_hbm [thread:$0]  %s314, 256, %s6, [#allocation4], 128, 128, 8
    $region45: #{tpu_custom_call.1} parent=1 // pred_fallthru
      _
    // Predicated region
    $region46: #{tpu_custom_call.1} parent=1 // pred_check
      _
    $region47: #{tpu_custom_call.1} parent=1 // pred_check_branch
      %321 = sbr.rel (0) target = $region49
    $region48: #{tpu_custom_call.1} parent=1 // pred_region
      %s323 = ssub.s32 256, 256
      %324 = vsyncadd [#allocation12], %s323
      %s325 = sshll.u32 [#allocation11], 4
      %s326 = int_to_ptr.vmem [resolvable:$true] %s325
      %331 = dma.vmem_to_hbm [thread:$0]  %s326, 256, %s7, [#allocation12], 128, 128, 8
    $region49: #{tpu_custom_call.1} parent=1 // pred_fallthru
      _
    // Predicated region
    $region50: #{tpu_custom_call.1} parent=1 // pred_check
      _
    $region51: #{tpu_custom_call.1} parent=1 // pred_check_branch
      %333 = sbr.rel (0) target = $region53
    $region52: #{tpu_custom_call.1} parent=1 // pred_region
      %334 = dma.done [#allocation4], 256
    $region53: #{tpu_custom_call.1} parent=1 // pred_fallthru
      _
    // Predicated region
    $region54: #{tpu_custom_call.1} parent=1 // pred_check
      _
    $region55: #{tpu_custom_call.1} parent=1 // pred_check_branch
      %336 = sbr.rel (0) target = $region57
    $region56: #{tpu_custom_call.1} parent=1 // pred_region
      %337 = dma.done [#allocation12], 256
    $region57: #{tpu_custom_call.1} parent=1 // pred_fallthru
      _
    %338 = vsyncpa [#allocation3], 1
    %339 = vsyncpa [#allocation6], 1
    %340 = vsyncpa [#allocation9], 1
    %341 = vsyncpa [#allocation4], 1
    %342 = vsyncpa [#allocation12], 1

</llo_original>
